<compile_context>
chip_gen: v5e
topology: v5e:2x2
jax: 0.10.0
libtpu: 0.0.40
codegen_flags: <defaults>
</compile_context>

<pallas_src>
import functools

import jax
import jax.numpy as jnp
from jax import lax
from jax.experimental import pallas as pl
from jax.experimental.pallas import tpu as pltpu


def _round_up(x, m):
    return (x + m - 1) // m * m


def _pad_lane_dim(d):
    """Pad an output lane dim to a multiple of 128 only if the overhead is
    <= 25%; otherwise keep the natural width (the block then spans the full
    array dim, which is allowed, and the HBM writeback shrinks)."""
    p = _round_up(d, 128)
    return p if 4 * p <= 5 * d else d


def _tpu_policy():
    """(cores_to_balance, vmem_limit_bytes) for the current TPU generation."""
    kind = ""
    try:
        dev = jax.devices()[0]
        if dev.platform == "tpu":
            kind = dev.device_kind.lower()
    except Exception:
        pass
    if "v7" in kind:
        return 2, 40 << 20            # 2 TensorCores/chip, 64 MiB VMEM per TC
    if "v6" in kind or "v5e" in kind or "v5 lite" in kind or "v5lite" in kind:
        return 1, 96 << 20            # single TC, 128 MiB VMEM
    if "v4" in kind or "v5" in kind:
        return 2, 96 << 20            # v4 / v5p megacore
    return 2, 40 << 20                # unknown: conservative


def _choose_batch_tile(B, per_row_bytes, fixed_bytes, vmem_limit, cores):
    """Pick (tb, B_pad): batch rows per grid step and padded batch size."""
    budget = max(vmem_limit - fixed_bytes, per_row_bytes)
    tb_cap = max(8, int(budget // per_row_bytes) // 8 * 8)
    if B <= 8 or (cores == 1 and B <= tb_cap):
        return B, B                   # one grid step; blocks span the batch
    steps = pl.cdiv(B, tb_cap)
    if cores > 1:
        steps = max(2, steps + (steps % 2))
    tb = min(tb_cap, _round_up(pl.cdiv(B, steps), 8))
    steps = pl.cdiv(B, tb)
    if cores > 1:
        steps += steps % 2            # even step count keeps both TCs busy
    return tb, steps * tb


def text_encoder_kernel(h_ref, bias_ref, wg_ref, bg_ref, ws_ref, bs_ref,
                        g_ref, s_ref, *, seq_dim, seq_pad, approx_recip,
                        mxu_pooling):
    """One grid step processes TB batch rows.

    h_ref    : (TB, S, Hb)     last_hidden tile, stream dtype (f32 or bf16)
    bias_ref : (TB, S)         additive mask bias ((mask-1)*1e9), f32
    wg_ref   : (Hb, Hd_pad)    fc_global weight (in, out), stream dtype
    bg_ref   : (1, Hd_pad)     fc_global bias, f32
    ws_ref   : (Hb, Sd_pad)    fc_seq weight (in, out), stream dtype
    bs_ref   : (1, Sd_pad)     fc_seq bias, f32
    g_ref    : (TB, Hd_pad)    global embedding tile
    s_ref    : (TB*S, Sd_pad)  flattened sequence embedding tile
    """
    tb, s_len, hb = h_ref.shape
    h = h_ref[...]                                   # keep stream dtype (no f32 upcast)
    cls = h[:, 0, :]                                 # (TB, Hb)

    # ---- CLS-query attention pooling ----
    if mxu_pooling:
        # flash-style batched matmuls: no (TB, S, Hb) temporaries, MXU does the
        # reductions, bf16 x bf16 -> f32 accumulation when streaming bf16.
        scores = jnp.einsum('bqd,bkd->bqk', h[:, 0:1, :], h,
                            preferred_element_type=jnp.float32)[:, 0, :]   # (TB, S)
    else:
        # VPU fallback (always lowers); f32 accumulation.
        scores = jnp.sum(h * cls[:, None, :], axis=-1, dtype=jnp.float32)

    scores = scores + bias_ref[...]                  # masked positions get -1e9
    m = jnp.max(scores, axis=-1, keepdims=True)
    e = jnp.exp(scores - m)                          # (TB, S) f32
    denom = jnp.sum(e, axis=-1, keepdims=True)       # (TB, 1)

    if mxu_pooling:
        ctx = jnp.einsum('bqk,bkd->bqd', e[:, None, :].astype(h.dtype), h,
                         preferred_element_type=jnp.float32)[:, 0, :]      # (TB, Hb)
    else:
        ctx = jnp.sum(e[:, :, None].astype(h.dtype) * h, axis=1,
                      dtype=jnp.float32)

    if approx_recip:
        ctx = ctx * pl.reciprocal(denom, approx=True)   # EUP slot, free-ish
    else:
        ctx = ctx / denom
    # NOTE: fully-padded batch rows have all scores == -1e9 -> uniform softmax
    # over zero rows; harmless because those rows are sliced off in the wrapper.
    combined = (cls.astype(jnp.float32) + ctx) * 0.5    # (TB, Hb) f32

    # ---- global branch: (TB, Hb) @ (Hb, Hd_pad) on the MXU ----
    g = jnp.dot(combined.astype(wg_ref.dtype), wg_ref[...],
                preferred_element_type=jnp.float32) + bg_ref[...]
    # zero-padded columns (if any) do not perturb the L2 norm
    g_norm = jnp.sqrt(jnp.sum(g * g, axis=-1, keepdims=True))
    g_ref[...] = (g * (0.9 / jnp.maximum(g_norm, 1e-8))).astype(g_ref.dtype)

    # ---- sequence branch: (TB*S, Hb) @ (Hb, Sd_pad) + layer norm ----
    h2 = h.reshape(tb * s_len, hb)        # sublane-only merge (S % tile == 0)
    se = jnp.dot(h2, ws_ref[...],
                 preferred_element_type=jnp.float32) + bs_ref[...]   # (TB*S, Sdp)
    inv_d = 1.0 / float(seq_dim)
    mu = jnp.sum(se, axis=-1, keepdims=True) * inv_d    # padded cols are 0
    cen = se - mu
    ssq = jnp.sum(cen * cen, axis=-1, keepdims=True)
    if seq_pad:
        ssq = ssq - float(seq_pad) * (mu * mu)          # remove (0 - mu)^2 pads
    var = ssq * inv_d
    s_ref[...] = (cen * lax.rsqrt(var + 1e-5)).astype(s_ref.dtype)


def text_encoder_forward(last_hidden, attention_mask, wg, bg, ws, bs,
                         *, stream_dtype=jnp.float32, seq_out_dtype=None):
    """last_hidden: (B, S, Hb); attention_mask: (B, S) float {0,1};
       wg: (Hb, Hd), bg: (Hd,), ws: (Hb, Sd), bs: (Sd,).

    Returns (global_emb (B, Hd), seq_emb (B, S, Sd)) in float32.
    stream_dtype=jnp.bfloat16 halves the HBM traffic of last_hidden and the
    weights and runs the matmuls on the bf16 MXU path (f32 accumulation).
    """
    B, S, Hb = last_hidden.shape
    Hd = wg.shape[1]
    Sd = ws.shape[1]
    if seq_out_dtype is None:
        seq_out_dtype = jnp.float32

    in_itm = jnp.dtype(stream_dtype).itemsize
    out_itm = jnp.dtype(seq_out_dtype).itemsize
    sub = 16 if in_itm == 2 else 8            # sublane tile (bf16 packs pairs)

    # Lane-pad S to 128 only when nearly free (<= ~6% extra rows); padding S
    # inflates the dominant h read and the seq matmul, so keep it tight.
    S_128 = _round_up(S, 128)
    S_pad = S_128 if S_128 * 16 <= 17 * S else _round_up(S, sub)

    Hd_pad = _pad_lane_dim(Hd)
    Sd_pad = _pad_lane_dim(Sd)

    # ---- generation-aware tile selection (temporary-aware VMEM accounting) ----
    cores, vmem_limit = _tpu_policy()
    hb_l = _round_up(Hb, 128)
    sp_l = _round_up(S_pad, 128)
    sd_l = _round_up(Sd_pad, 128)
    hd_l = _round_up(Hd_pad, 128)
    per_row = (2 * S_pad * hb_l * in_itm       # double-buffered input tile
               + 2 * sp_l * 4                  # mask-bias tile
               + 2 * S_pad * sd_l * out_itm    # seq output tile
               + 2 * hd_l * 4                  # global output tile
               + 2 * S_pad * sd_l * 4          # f32 matmul result + centered
               + 4 * sp_l * 4 + 6 * hb_l * 4)  # softmax / pooling temporaries
    fixed = (2 * Hb * (hd_l + sd_l) * in_itm   # resident (buffered) weights
             + 2 * (hd_l + sd_l) * 4           # biases
             + (3 << 20))                      # compiler scratch / headroom
    tb, B_pad = _choose_batch_tile(B, per_row, fixed, vmem_limit, cores)
    grid = (B_pad // tb,)

    # ---- pad / repack inputs ----
    h = last_hidden.astype(stream_dtype)
    mask = attention_mask.astype(jnp.float32)
    if (B_pad, S_pad) != (B, S):
        h = jnp.pad(h, ((0, B_pad - B), (0, S_pad - S), (0, 0)))
        mask = jnp.pad(mask, ((0, B_pad - B), (0, S_pad - S)))
    bias = (mask - 1.0) * 1e9                 # additive mask bias (0 or -1e9)

    wg_p = jnp.pad(wg, ((0, 0), (0, Hd_pad - Hd))).astype(stream_dtype)
    bg_p = jnp.pad(bg, ((0, Hd_pad - Hd),)).astype(jnp.float32).reshape(1, Hd_pad)
    ws_p = jnp.pad(ws, ((0, 0), (0, Sd_pad - Sd))).astype(stream_dtype)
    bs_p = jnp.pad(bs, ((0, Sd_pad - Sd),)).astype(jnp.float32).reshape(1, Sd_pad)

    flops = int(2 * B_pad * S_pad * Hb * (Sd_pad + 2) + 2 * B_pad * Hb * Hd_pad)
    bytes_accessed = int(B_pad * S_pad * Hb * in_itm + B_pad * S_pad * 4
                         + Hb * (Hd_pad + Sd_pad) * in_itm
                         + B_pad * Hd_pad * 4
                         + B_pad * S_pad * Sd_pad * out_itm)
    cost = pl.CostEstimate(flops=flops,
                           transcendentals=int(2 * B_pad * S_pad),
                           bytes_accessed=bytes_accessed)

    def _call(mxu_pooling):
        kernel = functools.partial(
            text_encoder_kernel, seq_dim=Sd, seq_pad=Sd_pad - Sd,
            approx_recip=(in_itm < 4), mxu_pooling=mxu_pooling)
        return pl.pallas_call(
            kernel,
            out_shape=(jax.ShapeDtypeStruct((B_pad, Hd_pad), jnp.float32),
                       jax.ShapeDtypeStruct((B_pad * S_pad, Sd_pad),
                                            seq_out_dtype)),
            grid_spec=pltpu.PrefetchScalarGridSpec(
                num_scalar_prefetch=0,
                grid=grid,
                in_specs=[
                    pl.BlockSpec((tb, S_pad, Hb), lambda t: (t, 0, 0)),
                    pl.BlockSpec((tb, S_pad), lambda t: (t, 0)),
                    pl.BlockSpec((Hb, Hd_pad), lambda t: (0, 0)),
                    pl.BlockSpec((1, Hd_pad), lambda t: (0, 0)),
                    pl.BlockSpec((Hb, Sd_pad), lambda t: (0, 0)),
                    pl.BlockSpec((1, Sd_pad), lambda t: (0, 0)),
                ],
                out_specs=[
                    pl.BlockSpec((tb, Hd_pad), lambda t: (t, 0)),
                    pl.BlockSpec((tb * S_pad, Sd_pad), lambda t: (t, 0)),
                ],
            ),
            compiler_params=pltpu.CompilerParams(
                dimension_semantics=("parallel",),
                vmem_limit_bytes=int(vmem_limit)),
            cost_estimate=cost,
        )(h, bias, wg_p, bg_p, ws_p, bs_p)

    try:
        g_out, s_out = _call(True)
    except Exception:
        # TODO(synk): batched-einsum pooling failed to lower on this
        # jax/libtpu combo; fall back to the VPU reduce form (same math).
        g_out, s_out = _call(False)

    global_emb = g_out[:B, :Hd].astype(jnp.float32)
    seq_emb = (s_out.reshape(B_pad, S_pad, Sd_pad)[:B, :S, :Sd]
               .astype(jnp.float32))
    return global_emb, seq_emb


def reference_forward(last_hidden, attention_mask, wg, bg, ws, bs):
    """Pure-JAX reproduction of the PyTorch semantics (eval mode)."""
    cls = last_hidden[:, 0, :]                                     # (B, Hb)
    scores = jnp.einsum('bh,bsh->bs', cls, last_hidden)            # (B, S)
    scores = jnp.where(attention_mask == 0, -1e9, scores)
    attn = jax.nn.softmax(scores, axis=-1)                         # (B, S)
    ctx = jnp.einsum('bs,bsh->bh', attn, last_hidden)              # (B, Hb)
    combined = (cls + ctx) * 0.5
    g = combined @ wg + bg
    g = g / jnp.maximum(jnp.linalg.norm(g, axis=-1, keepdims=True), 1e-8) * 0.9
    se = last_hidden @ ws + bs
    mu = jnp.mean(se, axis=-1, keepdims=True)
    var = jnp.mean((se - mu) ** 2, axis=-1, keepdims=True)
    se = (se - mu) / jnp.sqrt(var + 1e-5)
    return g, se


def xavier_uniform(key, fan_in, fan_out):
    bound = (6.0 / (fan_in + fan_out)) ** 0.5
    return jax.random.uniform(key, (fan_in, fan_out), jnp.float32,
                              minval=-bound, maxval=bound)


if __name__ == "__main__":
    # Small, forward-consistent shapes.
    B, S = 2, 8           # batch, padded phoneme sequence length
    HB = 32               # PL-BERT hidden size (synthetic stand-in)
    HIDDEN_DIM = 32       # global embedding dim (FiLM)
    SEQ_DIM = 16          # sequence embedding dim (cross-attention)

    key = jax.random.PRNGKey(0)
    k_h, k_g, k_s = jax.random.split(key, 3)

    # Synthetic PL-BERT output + attention mask (ragged valid lengths).
    # TODO(synk): phonemizer/tokenizer/AlbertModel (checkpoint-dependent) are
    # not reproducible in-kernel; last_hidden stands in for plbert(...) output.
    last_hidden = jax.random.normal(k_h, (B, S, HB), jnp.float32)
    lengths = jnp.array([S, 5], dtype=jnp.int32)
    attention_mask = (jnp.arange(S)[None, :] < lengths[:, None]).astype(jnp.float32)

    # fc_global / fc_seq params: xavier_uniform weights, zero biases.
    wg = xavier_uniform(k_g, HB, HIDDEN_DIM)
    bg = jnp.zeros((HIDDEN_DIM,), jnp.float32)
    ws = xavier_uniform(k_s, HB, SEQ_DIM)
    bs = jnp.zeros((SEQ_DIM,), jnp.float32)

    # ---- float32 streaming path (faithful to the torch module) ----
    global_emb, seq_emb = text_encoder_forward(
        last_hidden, attention_mask, wg, bg, ws, bs)
    jax.block_until_ready((global_emb, seq_emb))

    g_ref, s_ref = reference_forward(
        last_hidden, attention_mask, wg, bg, ws, bs)

    assert global_emb.shape == (B, HIDDEN_DIM)
    assert seq_emb.shape == (B, S, SEQ_DIM)
    assert jnp.allclose(global_emb, g_ref, atol=2e-5, rtol=2e-5)
    assert jnp.allclose(seq_emb, s_ref, atol=2e-5, rtol=2e-5)

    # ---- bf16 streaming path (bf16 HBM traffic + bf16 MXU matmuls) ----
    g_bf, s_bf = text_encoder_forward(
        last_hidden, attention_mask, wg, bg, ws, bs,
        stream_dtype=jnp.bfloat16)
    jax.block_until_ready((g_bf, s_bf))

    lh_bf = last_hidden.astype(jnp.bfloat16).astype(jnp.float32)
    wg_bf = wg.astype(jnp.bfloat16).astype(jnp.float32)
    ws_bf = ws.astype(jnp.bfloat16).astype(jnp.float32)
    g_ref_bf, s_ref_bf = reference_forward(
        lh_bf, attention_mask, wg_bf, bg, ws_bf, bs)
    assert jnp.allclose(g_bf, g_ref_bf, atol=3e-2, rtol=3e-2)
    assert jnp.allclose(s_bf, s_ref_bf, atol=3e-2, rtol=3e-2)

    print("KERNEL_OK")
</pallas_src>

<mosaic_0001>
module attributes {stable_mosaic.version = 11 : i64} {
  func.func @text_encoder_kernel(%arg0: i32, %arg1: memref<2x8x32xf32, #tpu.memory_space<vmem>>, %arg2: memref<2x8xf32, #tpu.memory_space<vmem>>, %arg3: memref<32x32xf32, #tpu.memory_space<vmem>>, %arg4: memref<1x32xf32, #tpu.memory_space<vmem>>, %arg5: memref<32x16xf32, #tpu.memory_space<vmem>>, %arg6: memref<1x16xf32, #tpu.memory_space<vmem>>, %arg7: memref<2x32xf32, #tpu.memory_space<vmem>>, %arg8: memref<16x16xf32, #tpu.memory_space<vmem>>) attributes {dimension_semantics = [#tpu.dimension_semantics<parallel>], iteration_bounds = array<i64: 1>, scalar_prefetch = 0 : i64, scratch_operands = 0 : i64, tpu.core_type = #tpu.core_type<tc>, window_params = [{transform_indices = @transform_0, window_bounds = array<i64: 2, 8, 32>}, {transform_indices = @transform_1, window_bounds = array<i64: 2, 8>}, {pipeline_mode = #tpu.pipeline_mode<synchronous>, transform_indices = @transform_2, window_bounds = array<i64: 32, 32>}, {pipeline_mode = #tpu.pipeline_mode<synchronous>, transform_indices = @transform_3, window_bounds = array<i64: 1, 32>}, {pipeline_mode = #tpu.pipeline_mode<synchronous>, transform_indices = @transform_4, window_bounds = array<i64: 32, 16>}, {pipeline_mode = #tpu.pipeline_mode<synchronous>, transform_indices = @transform_5, window_bounds = array<i64: 1, 16>}, {transform_indices = @transform_6, window_bounds = array<i64: 2, 32>}, {transform_indices = @transform_7, window_bounds = array<i64: 16, 16>}]} {
    %c0 = arith.constant 0 : index
    %c0_0 = arith.constant 0 : index
    %c0_1 = arith.constant 0 : index
    %0 = vector.load %arg1[%c0, %c0_0, %c0_1] : memref<2x8x32xf32, #tpu.memory_space<vmem>>, vector<2x8x32xf32>
    %1 = vector.extract_strided_slice %0 {offsets = [0, 0, 0], sizes = [2, 1, 32], strides = [1, 1, 1]} : vector<2x8x32xf32> to vector<2x1x32xf32>
    %2 = vector.shape_cast %1 : vector<2x1x32xf32> to vector<2x32xf32>
    %3 = vector.extract_strided_slice %0 {offsets = [0, 0, 0], sizes = [2, 1, 32], strides = [1, 1, 1]} : vector<2x8x32xf32> to vector<2x1x32xf32>
    "tpu.trace_start"() <{level = 10 : i32, message = "bqd,bkd->bqk"}> : () -> ()
    %cst = arith.constant dense<0.000000e+00> : vector<2x1x8xf32>
    %4 = tpu.matmul %3, %0, %cst {dimension_numbers = #tpu.dot_dimension_numbers<[2], [2], [1], [1], [0, 0, 0, 1, 1, 1], [0], [0]>} : vector<2x1x32xf32>, vector<2x8x32xf32>, vector<2x1x8xf32> -> vector<2x1x8xf32>
    "tpu.trace_stop"() : () -> ()
    %5 = vector.shape_cast %4 : vector<2x1x8xf32> to vector<2x8xf32>
    %c0_2 = arith.constant 0 : index
    %c0_3 = arith.constant 0 : index
    %6 = vector.load %arg2[%c0_2, %c0_3] : memref<2x8xf32, #tpu.memory_space<vmem>>, vector<2x8xf32>
    %7 = arith.addf %5, %6 : vector<2x8xf32>
    %cst_4 = arith.constant dense<0xFF800000> : vector<2xf32>
    %8 = vector.multi_reduction <maximumf>, %7, %cst_4 [1] : vector<2x8xf32> to vector<2xf32>
    %9 = vector.shape_cast %8 : vector<2xf32> to vector<2x1xf32>
    %10 = vector.broadcast %9 : vector<2x1xf32> to vector<2x8xf32>
    %11 = arith.subf %7, %10 : vector<2x8xf32>
    %12 = math.exp %11 : vector<2x8xf32>
    %cst_5 = arith.constant dense<0.000000e+00> : vector<2xf32>
    %13 = vector.multi_reduction <add>, %12, %cst_5 [1] : vector<2x8xf32> to vector<2xf32>
    %14 = vector.shape_cast %13 : vector<2xf32> to vector<2x1xf32>
    %15 = vector.shape_cast %12 : vector<2x8xf32> to vector<2x1x8xf32>
    "tpu.trace_start"() <{level = 10 : i32, message = "bqk,bkd->bqd"}> : () -> ()
    %cst_6 = arith.constant dense<0.000000e+00> : vector<2x1x32xf32>
    %16 = tpu.matmul %15, %0, %cst_6 {dimension_numbers = #tpu.dot_dimension_numbers<[2], [1], [1], [2], [0, 0, 0, 1, 1, 2], [0], [0]>} : vector<2x1x8xf32>, vector<2x8x32xf32>, vector<2x1x32xf32> -> vector<2x1x32xf32>
    "tpu.trace_stop"() : () -> ()
    %17 = vector.shape_cast %16 : vector<2x1x32xf32> to vector<2x32xf32>
    %18 = vector.broadcast %14 : vector<2x1xf32> to vector<2x32xf32>
    %19 = arith.divf %17, %18 : vector<2x32xf32>
    %20 = arith.addf %2, %19 : vector<2x32xf32>
    %cst_7 = arith.constant 5.000000e-01 : f32
    %21 = vector.broadcast %cst_7 : f32 to vector<2x32xf32>
    %22 = arith.mulf %20, %21 : vector<2x32xf32>
    %c0_8 = arith.constant 0 : index
    %c0_9 = arith.constant 0 : index
    %23 = vector.load %arg3[%c0_8, %c0_9] : memref<32x32xf32, #tpu.memory_space<vmem>>, vector<32x32xf32>
    %cst_10 = arith.constant dense<0.000000e+00> : vector<2x32xf32>
    %24 = tpu.matmul %22, %23, %cst_10 {dimension_numbers = #tpu.dot_dimension_numbers<[1], [0], [0], [1], [0, 0, 1, 1], [], []>} : vector<2x32xf32>, vector<32x32xf32>, vector<2x32xf32> -> vector<2x32xf32>
    %c0_11 = arith.constant 0 : index
    %c0_12 = arith.constant 0 : index
    %25 = vector.load %arg4[%c0_11, %c0_12] : memref<1x32xf32, #tpu.memory_space<vmem>>, vector<1x32xf32>
    %26 = vector.broadcast %25 : vector<1x32xf32> to vector<2x32xf32>
    %27 = arith.addf %24, %26 : vector<2x32xf32>
    %28 = arith.mulf %27, %27 : vector<2x32xf32>
    %cst_13 = arith.constant dense<0.000000e+00> : vector<2xf32>
    %29 = vector.multi_reduction <add>, %28, %cst_13 [1] : vector<2x32xf32> to vector<2xf32>
    %30 = vector.shape_cast %29 : vector<2xf32> to vector<2x1xf32>
    %31 = math.sqrt %30 : vector<2x1xf32>
    %cst_14 = arith.constant 9.99999993E-9 : f32
    %32 = vector.broadcast %cst_14 : f32 to vector<2x1xf32>
    %33 = arith.maximumf %31, %32 : vector<2x1xf32>
    %cst_15 = arith.constant 0.899999976 : f32
    %34 = vector.broadcast %cst_15 : f32 to vector<2x1xf32>
    %35 = arith.divf %34, %33 : vector<2x1xf32>
    %36 = vector.broadcast %35 : vector<2x1xf32> to vector<2x32xf32>
    %37 = arith.mulf %27, %36 : vector<2x32xf32>
    %c0_16 = arith.constant 0 : index
    %c0_17 = arith.constant 0 : index
    %38 = vector.load %arg7[%c0_16, %c0_17] : memref<2x32xf32, #tpu.memory_space<vmem>>, vector<2x32xf32>
    tpu.vector_store %arg7[%c0_16, %c0_17], %37 {strides = array<i32>} : memref<2x32xf32, #tpu.memory_space<vmem>>, vector<2x32xf32>,
    %39 = vector.shape_cast %0 : vector<2x8x32xf32> to vector<16x32xf32>
    %c0_18 = arith.constant 0 : index
    %c0_19 = arith.constant 0 : index
    %40 = vector.load %arg5[%c0_18, %c0_19] : memref<32x16xf32, #tpu.memory_space<vmem>>, vector<32x16xf32>
    %cst_20 = arith.constant dense<0.000000e+00> : vector<16x16xf32>
    %41 = tpu.matmul %39, %40, %cst_20 {dimension_numbers = #tpu.dot_dimension_numbers<[1], [0], [0], [1], [0, 0, 1, 1], [], []>} : vector<16x32xf32>, vector<32x16xf32>, vector<16x16xf32> -> vector<16x16xf32>
    %c0_21 = arith.constant 0 : index
    %c0_22 = arith.constant 0 : index
    %42 = vector.load %arg6[%c0_21, %c0_22] : memref<1x16xf32, #tpu.memory_space<vmem>>, vector<1x16xf32>
    %43 = vector.broadcast %42 : vector<1x16xf32> to vector<16x16xf32>
    %44 = arith.addf %41, %43 : vector<16x16xf32>
    %cst_23 = arith.constant dense<0.000000e+00> : vector<16xf32>
    %45 = vector.multi_reduction <add>, %44, %cst_23 [1] : vector<16x16xf32> to vector<16xf32>
    %46 = vector.shape_cast %45 : vector<16xf32> to vector<16x1xf32>
    %cst_24 = arith.constant 6.250000e-02 : f32
    %47 = vector.broadcast %cst_24 : f32 to vector<16x1xf32>
    %48 = arith.mulf %46, %47 : vector<16x1xf32>
    %49 = vector.broadcast %48 : vector<16x1xf32> to vector<16x16xf32>
    %50 = arith.subf %44, %49 : vector<16x16xf32>
    %51 = arith.mulf %50, %50 : vector<16x16xf32>
    %cst_25 = arith.constant dense<0.000000e+00> : vector<16xf32>
    %52 = vector.multi_reduction <add>, %51, %cst_25 [1] : vector<16x16xf32> to vector<16xf32>
    %53 = vector.shape_cast %52 : vector<16xf32> to vector<16x1xf32>
    %cst_26 = arith.constant 6.250000e-02 : f32
    %54 = vector.broadcast %cst_26 : f32 to vector<16x1xf32>
    %55 = arith.mulf %53, %54 : vector<16x1xf32>
    %cst_27 = arith.constant 9.99999974E-6 : f32
    %56 = vector.broadcast %cst_27 : f32 to vector<16x1xf32>
    %57 = arith.addf %55, %56 : vector<16x1xf32>
    %58 = math.rsqrt %57 : vector<16x1xf32>
    %59 = vector.broadcast %58 : vector<16x1xf32> to vector<16x16xf32>
    %60 = arith.mulf %50, %59 : vector<16x16xf32>
    %c0_28 = arith.constant 0 : index
    %c0_29 = arith.constant 0 : index
    %61 = vector.load %arg8[%c0_28, %c0_29] : memref<16x16xf32, #tpu.memory_space<vmem>>, vector<16x16xf32>
    tpu.vector_store %arg8[%c0_28, %c0_29], %60 {strides = array<i32>} : memref<16x16xf32, #tpu.memory_space<vmem>>, vector<16x16xf32>,
    return
  }
  func.func @transform_0(%arg0: i32) -> (i32, i32, i32) {
    %c0_i32 = arith.constant 0 : i32
    %c0_i32_0 = arith.constant 0 : i32
    %c0_i32_1 = arith.constant 0 : i32
    return %arg0, %c0_i32, %c0_i32_0 : i32, i32, i32
  }
  func.func @transform_1(%arg0: i32) -> (i32, i32) {
    %c0_i32 = arith.constant 0 : i32
    %c0_i32_0 = arith.constant 0 : i32
    return %arg0, %c0_i32 : i32, i32
  }
  func.func @transform_2(%arg0: i32) -> (i32, i32) {
    %c0_i32 = arith.constant 0 : i32
    %c0_i32_0 = arith.constant 0 : i32
    %c0_i32_1 = arith.constant 0 : i32
    return %c0_i32, %c0_i32_0 : i32, i32
  }
  func.func @transform_3(%arg0: i32) -> (i32, i32) {
    %c0_i32 = arith.constant 0 : i32
    %c0_i32_0 = arith.constant 0 : i32
    %c0_i32_1 = arith.constant 0 : i32
    return %c0_i32, %c0_i32_0 : i32, i32
  }
  func.func @transform_4(%arg0: i32) -> (i32, i32) {
    %c0_i32 = arith.constant 0 : i32
    %c0_i32_0 = arith.constant 0 : i32
    %c0_i32_1 = arith.constant 0 : i32
    return %c0_i32, %c0_i32_0 : i32, i32
  }
  func.func @transform_5(%arg0: i32) -> (i32, i32) {
    %c0_i32 = arith.constant 0 : i32
    %c0_i32_0 = arith.constant 0 : i32
    %c0_i32_1 = arith.constant 0 : i32
    return %c0_i32, %c0_i32_0 : i32, i32
  }
  func.func @transform_6(%arg0: i32) -> (i32, i32) {
    %c0_i32 = arith.constant 0 : i32
    %c0_i32_0 = arith.constant 0 : i32
    return %arg0, %c0_i32 : i32, i32
  }
  func.func @transform_7(%arg0: i32) -> (i32, i32) {
    %c0_i32 = arith.constant 0 : i32
    %c0_i32_0 = arith.constant 0 : i32
    return %arg0, %c0_i32 : i32, i32
  }
}

module attributes {stable_mosaic.version = 11 : i64} {
  func.func @text_encoder_kernel(%arg0: i32, %arg1: memref<2x8x32xf32, #tpu.memory_space<vmem>>, %arg2: memref<2x8xf32, #tpu.memory_space<vmem>>, %arg3: memref<32x32xf32, #tpu.memory_space<vmem>>, %arg4: memref<1x32xf32, #tpu.memory_space<vmem>>, %arg5: memref<32x16xf32, #tpu.memory_space<vmem>>, %arg6: memref<1x16xf32, #tpu.memory_space<vmem>>, %arg7: memref<2x32xf32, #tpu.memory_space<vmem>>, %arg8: memref<16x16xf32, #tpu.memory_space<vmem>>) attributes {dimension_semantics = [#tpu.dimension_semantics<parallel>], iteration_bounds = array<i64: 1>, scalar_prefetch = 0 : i64, scratch_operands = 0 : i64, tpu.core_type = #tpu.core_type<tc>, window_params = [{transform_indices = @transform_0, window_bounds = array<i64: 2, 8, 32>}, {transform_indices = @transform_1, window_bounds = array<i64: 2, 8>}, {pipeline_mode = #tpu.pipeline_mode<synchronous>, transform_indices = @transform_2, window_bounds = array<i64: 32, 32>}, {pipeline_mode = #tpu.pipeline_mode<synchronous>, transform_indices = @transform_3, window_bounds = array<i64: 1, 32>}, {pipeline_mode = #tpu.pipeline_mode<synchronous>, transform_indices = @transform_4, window_bounds = array<i64: 32, 16>}, {pipeline_mode = #tpu.pipeline_mode<synchronous>, transform_indices = @transform_5, window_bounds = array<i64: 1, 16>}, {transform_indices = @transform_6, window_bounds = array<i64: 2, 32>}, {transform_indices = @transform_7, window_bounds = array<i64: 16, 16>}]} {
    %c0 = arith.constant 0 : index
    %c0_0 = arith.constant 0 : index
    %c0_1 = arith.constant 0 : index
    %0 = vector.load %arg1[%c0, %c0_0, %c0_1] : memref<2x8x32xf32, #tpu.memory_space<vmem>>, vector<2x8x32xf32>
    %1 = vector.extract_strided_slice %0 {offsets = [0, 0, 0], sizes = [2, 1, 32], strides = [1, 1, 1]} : vector<2x8x32xf32> to vector<2x1x32xf32>
    %2 = vector.shape_cast %1 : vector<2x1x32xf32> to vector<2x32xf32>
    %3 = vector.shape_cast %2 : vector<2x32xf32> to vector<2x1x32xf32>
    %4 = vector.broadcast %3 : vector<2x1x32xf32> to vector<2x8x32xf32>
    %5 = arith.mulf %0, %4 : vector<2x8x32xf32>
    %cst = arith.constant dense<0.000000e+00> : vector<2x8xf32>
    %6 = vector.multi_reduction <add>, %5, %cst [2] : vector<2x8x32xf32> to vector<2x8xf32>
    %c0_2 = arith.constant 0 : index
    %c0_3 = arith.constant 0 : index
    %7 = vector.load %arg2[%c0_2, %c0_3] : memref<2x8xf32, #tpu.memory_space<vmem>>, vector<2x8xf32>
    %8 = arith.addf %6, %7 : vector<2x8xf32>
    %cst_4 = arith.constant dense<0xFF800000> : vector<2xf32>
    %9 = vector.multi_reduction <maximumf>, %8, %cst_4 [1] : vector<2x8xf32> to vector<2xf32>
    %10 = vector.shape_cast %9 : vector<2xf32> to vector<2x1xf32>
    %11 = vector.broadcast %10 : vector<2x1xf32> to vector<2x8xf32>
    %12 = arith.subf %8, %11 : vector<2x8xf32>
    %13 = math.exp %12 : vector<2x8xf32>
    %cst_5 = arith.constant dense<0.000000e+00> : vector<2xf32>
    %14 = vector.multi_reduction <add>, %13, %cst_5 [1] : vector<2x8xf32> to vector<2xf32>
    %15 = vector.shape_cast %14 : vector<2xf32> to vector<2x1xf32>
    %16 = vector.shape_cast %13 : vector<2x8xf32> to vector<2x8x1xf32>
    %17 = vector.broadcast %16 : vector<2x8x1xf32> to vector<2x8x32xf32>
    %18 = arith.mulf %17, %0 : vector<2x8x32xf32>
    %cst_6 = arith.constant dense<0.000000e+00> : vector<2x32xf32>
    %19 = vector.multi_reduction <add>, %18, %cst_6 [1] : vector<2x8x32xf32> to vector<2x32xf32>
    %20 = vector.broadcast %15 : vector<2x1xf32> to vector<2x32xf32>
    %21 = arith.divf %19, %20 : vector<2x32xf32>
    %22 = arith.addf %2, %21 : vector<2x32xf32>
    %cst_7 = arith.constant 5.000000e-01 : f32
    %23 = vector.broadcast %cst_7 : f32 to vector<2x32xf32>
    %24 = arith.mulf %22, %23 : vector<2x32xf32>
    %c0_8 = arith.constant 0 : index
    %c0_9 = arith.constant 0 : index
    %25 = vector.load %arg3[%c0_8, %c0_9] : memref<32x32xf32, #tpu.memory_space<vmem>>, vector<32x32xf32>
    %cst_10 = arith.constant dense<0.000000e+00> : vector<2x32xf32>
    %26 = tpu.matmul %24, %25, %cst_10 {dimension_numbers = #tpu.dot_dimension_numbers<[1], [0], [0], [1], [0, 0, 1, 1], [], []>} : vector<2x32xf32>, vector<32x32xf32>, vector<2x32xf32> -> vector<2x32xf32>
    %c0_11 = arith.constant 0 : index
    %c0_12 = arith.constant 0 : index
    %27 = vector.load %arg4[%c0_11, %c0_12] : memref<1x32xf32, #tpu.memory_space<vmem>>, vector<1x32xf32>
    %28 = vector.broadcast %27 : vector<1x32xf32> to vector<2x32xf32>
    %29 = arith.addf %26, %28 : vector<2x32xf32>
    %30 = arith.mulf %29, %29 : vector<2x32xf32>
    %cst_13 = arith.constant dense<0.000000e+00> : vector<2xf32>
    %31 = vector.multi_reduction <add>, %30, %cst_13 [1] : vector<2x32xf32> to vector<2xf32>
    %32 = vector.shape_cast %31 : vector<2xf32> to vector<2x1xf32>
    %33 = math.sqrt %32 : vector<2x1xf32>
    %cst_14 = arith.constant 9.99999993E-9 : f32
    %34 = vector.broadcast %cst_14 : f32 to vector<2x1xf32>
    %35 = arith.maximumf %33, %34 : vector<2x1xf32>
    %cst_15 = arith.constant 0.899999976 : f32
    %36 = vector.broadcast %cst_15 : f32 to vector<2x1xf32>
    %37 = arith.divf %36, %35 : vector<2x1xf32>
    %38 = vector.broadcast %37 : vector<2x1xf32> to vector<2x32xf32>
    %39 = arith.mulf %29, %38 : vector<2x32xf32>
    %c0_16 = arith.constant 0 : index
    %c0_17 = arith.constant 0 : index
    %40 = vector.load %arg7[%c0_16, %c0_17] : memref<2x32xf32, #tpu.memory_space<vmem>>, vector<2x32xf32>
    tpu.vector_store %arg7[%c0_16, %c0_17], %39 {strides = array<i32>} : memref<2x32xf32, #tpu.memory_space<vmem>>, vector<2x32xf32>,
    %41 = vector.shape_cast %0 : vector<2x8x32xf32> to vector<16x32xf32>
    %c0_18 = arith.constant 0 : index
    %c0_19 = arith.constant 0 : index
    %42 = vector.load %arg5[%c0_18, %c0_19] : memref<32x16xf32, #tpu.memory_space<vmem>>, vector<32x16xf32>
    %cst_20 = arith.constant dense<0.000000e+00> : vector<16x16xf32>
    %43 = tpu.matmul %41, %42, %cst_20 {dimension_numbers = #tpu.dot_dimension_numbers<[1], [0], [0], [1], [0, 0, 1, 1], [], []>} : vector<16x32xf32>, vector<32x16xf32>, vector<16x16xf32> -> vector<16x16xf32>
    %c0_21 = arith.constant 0 : index
    %c0_22 = arith.constant 0 : index
    %44 = vector.load %arg6[%c0_21, %c0_22] : memref<1x16xf32, #tpu.memory_space<vmem>>, vector<1x16xf32>
    %45 = vector.broadcast %44 : vector<1x16xf32> to vector<16x16xf32>
    %46 = arith.addf %43, %45 : vector<16x16xf32>
    %cst_23 = arith.constant dense<0.000000e+00> : vector<16xf32>
    %47 = vector.multi_reduction <add>, %46, %cst_23 [1] : vector<16x16xf32> to vector<16xf32>
    %48 = vector.shape_cast %47 : vector<16xf32> to vector<16x1xf32>
    %cst_24 = arith.constant 6.250000e-02 : f32
    %49 = vector.broadcast %cst_24 : f32 to vector<16x1xf32>
    %50 = arith.mulf %48, %49 : vector<16x1xf32>
    %51 = vector.broadcast %50 : vector<16x1xf32> to vector<16x16xf32>
    %52 = arith.subf %46, %51 : vector<16x16xf32>
    %53 = arith.mulf %52, %52 : vector<16x16xf32>
    %cst_25 = arith.constant dense<0.000000e+00> : vector<16xf32>
    %54 = vector.multi_reduction <add>, %53, %cst_25 [1] : vector<16x16xf32> to vector<16xf32>
    %55 = vector.shape_cast %54 : vector<16xf32> to vector<16x1xf32>
    %cst_26 = arith.constant 6.250000e-02 : f32
    %56 = vector.broadcast %cst_26 : f32 to vector<16x1xf32>
    %57 = arith.mulf %55, %56 : vector<16x1xf32>
    %cst_27 = arith.constant 9.99999974E-6 : f32
    %58 = vector.broadcast %cst_27 : f32 to vector<16x1xf32>
    %59 = arith.addf %57, %58 : vector<16x1xf32>
    %60 = math.rsqrt %59 : vector<16x1xf32>
    %61 = vector.broadcast %60 : vector<16x1xf32> to vector<16x16xf32>
    %62 = arith.mulf %52, %61 : vector<16x16xf32>
    %c0_28 = arith.constant 0 : index
    %c0_29 = arith.constant 0 : index
    %63 = vector.load %arg8[%c0_28, %c0_29] : memref<16x16xf32, #tpu.memory_space<vmem>>, vector<16x16xf32>
    tpu.vector_store %arg8[%c0_28, %c0_29], %62 {strides = array<i32>} : memref<16x16xf32, #tpu.memory_space<vmem>>, vector<16x16xf32>,
    return
  }
  func.func @transform_0(%arg0: i32) -> (i32, i32, i32) {
    %c0_i32 = arith.constant 0 : i32
    %c0_i32_0 = arith.constant 0 : i32
    %c0_i32_1 = arith.constant 0 : i32
    return %arg0, %c0_i32, %c0_i32_0 : i32, i32, i32
  }
  func.func @transform_1(%arg0: i32) -> (i32, i32) {
    %c0_i32 = arith.constant 0 : i32
    %c0_i32_0 = arith.constant 0 : i32
    return %arg0, %c0_i32 : i32, i32
  }
  func.func @transform_2(%arg0: i32) -> (i32, i32) {
    %c0_i32 = arith.constant 0 : i32
    %c0_i32_0 = arith.constant 0 : i32
    %c0_i32_1 = arith.constant 0 : i32
    return %c0_i32, %c0_i32_0 : i32, i32
  }
  func.func @transform_3(%arg0: i32) -> (i32, i32) {
    %c0_i32 = arith.constant 0 : i32
    %c0_i32_0 = arith.constant 0 : i32
    %c0_i32_1 = arith.constant 0 : i32
    return %c0_i32, %c0_i32_0 : i32, i32
  }
  func.func @transform_4(%arg0: i32) -> (i32, i32) {
    %c0_i32 = arith.constant 0 : i32
    %c0_i32_0 = arith.constant 0 : i32
    %c0_i32_1 = arith.constant 0 : i32
    return %c0_i32, %c0_i32_0 : i32, i32
  }
  func.func @transform_5(%arg0: i32) -> (i32, i32) {
    %c0_i32 = arith.constant 0 : i32
    %c0_i32_0 = arith.constant 0 : i32
    %c0_i32_1 = arith.constant 0 : i32
    return %c0_i32, %c0_i32_0 : i32, i32
  }
  func.func @transform_6(%arg0: i32) -> (i32, i32) {
    %c0_i32 = arith.constant 0 : i32
    %c0_i32_0 = arith.constant 0 : i32
    return %arg0, %c0_i32 : i32, i32
  }
  func.func @transform_7(%arg0: i32) -> (i32, i32) {
    %c0_i32 = arith.constant 0 : i32
    %c0_i32_0 = arith.constant 0 : i32
    return %arg0, %c0_i32 : i32, i32
  }
}

</mosaic_0001>

<llo_original>
// kernel: tpu_custom_call.1
$region0: #{tpu_custom_call.1}
  #allocation0 [shape = 'u32[]', space=smem, size = 0x4, offset = 0x4, fixed_abs, tag = 'smem constant byte address 0x4 - core index']
  #allocation1 [shape = 'u32[72,128]{1,0:T(1,128)}', space=vmem, size = 0x9000, scoped, tag = 'internal scratch']
  %s0 = inlined_call_operand.vmem [shape: f32[2,8,32], index: 0, kind: input, shape index: {}]
  %s1 = inlined_call_operand.hbm [shape: f32[2,8], index: 1, kind: input, shape index: {}]
  %s2 = inlined_call_operand.vmem [shape: f32[32,32], index: 2, kind: input, shape index: {}]
  %s3 = inlined_call_operand.vmem [shape: f32[1,32], index: 3, kind: input, shape index: {}]
  %s4 = inlined_call_operand.vmem [shape: f32[32,16], index: 4, kind: input, shape index: {}]
  %s5 = inlined_call_operand.vmem [shape: f32[1,16], index: 5, kind: input, shape index: {}]
  %s6 = inlined_call_operand.hbm [shape: f32[2,32], index: 6, kind: output, shape index: {0}]
  %s7 = inlined_call_operand.hbm [shape: f32[16,16], index: 7, kind: output, shape index: {1}]
  %8 = xla_tuple %s6, %s7
  %s9 = sld [smem:[#allocation0]]
  $region46: #{tpu_custom_call.1} parent=0
    _
  %s11 = ssub.s32 1, %s9
  %s12 = scalar_select 0, %s11, %s9
  $region1: #{tpu_custom_call.1} parent=0
    #allocation2 [shape = 'u8[1024]{0}', space=vmem, size = 0x400, scoped, tag = 'input window, operand 1, single buffered']
    #allocation3 [shape = 's32[1]{0}', space=sflag, size = 0x4, scoped, tag = 'scoped memory for tpu_custom_call.1']
    #allocation4 [shape = 's32[1]{0}', space=sflag, size = 0x4, scoped, tag = 'scoped memory for tpu_custom_call.1']
    #allocation5 [shape = 'u8[1024]{0}', space=vmem, size = 0x400, scoped, tag = 'output window, operand 0, single buffered']
    #allocation6 [shape = 'u8[8192]{0}', space=vmem, size = 0x2000, scoped, tag = 'output window, operand 1, single buffered']
    #allocation7 [shape = 's32[1]{0}', space=sflag, size = 0x4, scoped, tag = 'scoped memory for tpu_custom_call.1']
    %13 = vsyncpa [#allocation3], 0
    %14 = vsyncpa [#allocation4], 0
    %15 = vsyncpa [#allocation7], 0
    // Predicated region
    $region2: #{tpu_custom_call.1} parent=1 // pred_check
      _
    $region3: #{tpu_custom_call.1} parent=1 // pred_check_branch
      %17 = sbr.rel (0) target = $region5
    $region4: #{tpu_custom_call.1} parent=1 // pred_region
      _
    $region5: #{tpu_custom_call.1} parent=1 // pred_fallthru
      _
    // Predicated region
    $region6: #{tpu_custom_call.1} parent=1 // pred_check
      _
    $region7: #{tpu_custom_call.1} parent=1 // pred_check_branch
      %19 = sbr.rel (0) target = $region9
    $region8: #{tpu_custom_call.1} parent=1 // pred_region
      %21 = vsyncadd [#allocation3], 0
      %s23 = sshll.u32 %s1, 4
      %s24 = int_to_ptr.hbm [resolvable:$true] %s23
      %s25 = sshll.u32 [#allocation2], 4
      %s26 = int_to_ptr.vmem [resolvable:$true] %s25
      %28 = dma.hbm_to_vmem [thread:$0]  %s24, 32, %s26, [#allocation3]
    $region9: #{tpu_custom_call.1} parent=1 // pred_fallthru
      _
    // Predicated region
    $region10: #{tpu_custom_call.1} parent=1 // pred_check
      _
    $region11: #{tpu_custom_call.1} parent=1 // pred_check_branch
      %30 = sbr.rel (0) target = $region13
    $region12: #{tpu_custom_call.1} parent=1 // pred_region
      _
    $region13: #{tpu_custom_call.1} parent=1 // pred_fallthru
      _
    // Predicated region
    $region14: #{tpu_custom_call.1} parent=1 // pred_check
      _
    $region15: #{tpu_custom_call.1} parent=1 // pred_check_branch
      %32 = sbr.rel (0) target = $region17
    $region16: #{tpu_custom_call.1} parent=1 // pred_region
      _
    $region17: #{tpu_custom_call.1} parent=1 // pred_fallthru
      _
    // Predicated region
    $region18: #{tpu_custom_call.1} parent=1 // pred_check
      _
    $region19: #{tpu_custom_call.1} parent=1 // pred_check_branch
      %34 = sbr.rel (0) target = $region21
    $region20: #{tpu_custom_call.1} parent=1 // pred_region
      _
    $region21: #{tpu_custom_call.1} parent=1 // pred_fallthru
      _
    // Predicated region
    $region22: #{tpu_custom_call.1} parent=1 // pred_check
      _
    $region23: #{tpu_custom_call.1} parent=1 // pred_check_branch
      %36 = sbr.rel (0) target = $region25
    $region24: #{tpu_custom_call.1} parent=1 // pred_region
      _
    $region25: #{tpu_custom_call.1} parent=1 // pred_fallthru
      _
    // Predicated region
    $region26: #{tpu_custom_call.1} parent=1 // pred_check
      _
    $region27: #{tpu_custom_call.1} parent=1 // pred_check_branch
      %38 = sbr.rel (0) target = $region29
    $region28: #{tpu_custom_call.1} parent=1 // pred_region
      %40 = dma.done [#allocation3], 32
    $region29: #{tpu_custom_call.1} parent=1 // pred_fallthru
      _
    %v41 = vld [vmem:[%s0] sm:$0xff]
    %v42 = vld [vmem:[%s0 + $0x8] sm:$0xff]
    %vm43 = vcmask 261120
    %v45 = vsel %vm43, %v41, 0
    %47 = vmatpush.xpose.msra.mxu0 0.0
    %48 = vmatpush.xpose.msra.mxu0 0.0
    %49 = vmatpush.xpose.msra.mxu0 0.0
    %50 = vmatpush.xpose.msra.mxu0 0.0
    %51 = vmatpush.xpose.msra.mxu0 0.0
    %52 = vmatpush.xpose.msra.mxu0 0.0
    %53 = vmatpush.xpose.msra.mxu0 0.0
    %54 = vmatpush.xpose.msra.mxu0 0.0
    %55 = vmatpush.xpose.msra.mxu0 0.0
    %56 = vmatpush.xpose.msra.mxu0 0.0
    %57 = vmatpush.xpose.msra.mxu0 0.0
    %58 = vmatpush.xpose.msra.mxu0 0.0
    %59 = vmatpush.xpose.msra.mxu0 0.0
    %60 = vmatpush.xpose.msra.mxu0 0.0
    %61 = vmatpush.xpose.msra.mxu0 0.0
    %62 = vmatpush.xpose.msra.mxu0 %v45
    %63 = vmatmul.f32.gmra.mxu0 %v45
    %v64 = vpop.f32.mrf.mxu0
    %v65 = vadd.f32 0.0, %v64
    %66 = vdwg.mxu0
    %v68 = vsel %vm43, %v42, 0
    %70 = vmatpush.xpose.msra.mxu0 0.0
    %71 = vmatpush.xpose.msra.mxu0 0.0
    %72 = vmatpush.xpose.msra.mxu0 0.0
    %73 = vmatpush.xpose.msra.mxu0 0.0
    %74 = vmatpush.xpose.msra.mxu0 0.0
    %75 = vmatpush.xpose.msra.mxu0 0.0
    %76 = vmatpush.xpose.msra.mxu0 0.0
    %77 = vmatpush.xpose.msra.mxu0 0.0
    %78 = vmatpush.xpose.msra.mxu0 0.0
    %79 = vmatpush.xpose.msra.mxu0 0.0
    %80 = vmatpush.xpose.msra.mxu0 0.0
    %81 = vmatpush.xpose.msra.mxu0 0.0
    %82 = vmatpush.xpose.msra.mxu0 0.0
    %83 = vmatpush.xpose.msra.mxu0 0.0
    %84 = vmatpush.xpose.msra.mxu0 0.0
    %85 = vmatpush.xpose.msra.mxu0 %v68
    %86 = vmatmul.f32.gmra.mxu0 %v68
    %v87 = vpop.f32.mrf.mxu0
    %v88 = vadd.f32 0.0, %v87
    %89 = vdwg.mxu0
    %v90 = vld [vmem:[#allocation2] sm:$0x3]
    %v92 = vrot.slane %v90, 1
    %v95 = vadd.f32 %v65, %v90
    %v96 = vadd.f32 %v88, %v92
    %v99 = vrot.slane %v96, 7
    %vm100 = vcmask 1041409
    %v101 = vsel %vm100, %v99, %v95
    %vm103 = vcmask 58368
    %v104 = vsel %vm103, %v101, -inf
    %105 = vmax.xlane.f32.xlu0 %v104
    %v106 = vpop.xlane.xlu0 %105
    %v108 = vrot.slane %v106, 1
    %v111 = vsub.f32 %v95, %v106
    %v112 = vsub.f32 %v96, %v108
    %v113 = vmul.f32 %v111, 1.442695
    %v114 = vpow.pop %v113
    %v115 = vmul.f32 %v112, 1.442695
    %v116 = vpow.pop %v115
    %v119 = vrot.slane %v116, 7
    %v120 = vsel %vm100, %v119, %v114
    %v122 = vsel %vm103, %v120, 0.0
    %123 = vadd.xlane.f32.xlu0 %v122
    %v124 = vpop.xlane.xlu0 %123
    %vm125 = vcmask 64512
    %v126 = vsel %vm125, %v114, 0
    %128 = vmatpush.msra.mxu0 0.0
    %129 = vmatpush.msra.mxu0 0.0
    %130 = vmatpush.msra.mxu0 0.0
    %131 = vmatpush.msra.mxu0 0.0
    %132 = vmatpush.msra.mxu0 0.0
    %133 = vmatpush.msra.mxu0 0.0
    %134 = vmatpush.msra.mxu0 0.0
    %135 = vmatpush.msra.mxu0 0.0
    %136 = vmatpush.msra.mxu0 0.0
    %137 = vmatpush.msra.mxu0 0.0
    %138 = vmatpush.msra.mxu0 0.0
    %139 = vmatpush.msra.mxu0 0.0
    %140 = vmatpush.msra.mxu0 0.0
    %141 = vmatpush.msra.mxu0 0.0
    %142 = vmatpush.msra.mxu0 0.0
    %143 = vmatpush.msra.mxu0 %v41
    %144 = vmatmul.f32.gmra.mxu0 %v126
    %v145 = vpop.f32.mrf.mxu0
    %v146 = vadd.f32 0.0, %v145
    %147 = vdwg.mxu0
    %v148 = vsel %vm125, %v116, 0
    %150 = vmatpush.msra.mxu0 0.0
    %151 = vmatpush.msra.mxu0 0.0
    %152 = vmatpush.msra.mxu0 0.0
    %153 = vmatpush.msra.mxu0 0.0
    %154 = vmatpush.msra.mxu0 0.0
    %155 = vmatpush.msra.mxu0 0.0
    %156 = vmatpush.msra.mxu0 0.0
    %157 = vmatpush.msra.mxu0 0.0
    %158 = vmatpush.msra.mxu0 0.0
    %159 = vmatpush.msra.mxu0 0.0
    %160 = vmatpush.msra.mxu0 0.0
    %161 = vmatpush.msra.mxu0 0.0
    %162 = vmatpush.msra.mxu0 0.0
    %163 = vmatpush.msra.mxu0 0.0
    %164 = vmatpush.msra.mxu0 0.0
    %165 = vmatpush.msra.mxu0 %v42
    %166 = vmatmul.f32.gmra.mxu0 %v148
    %v167 = vpop.f32.mrf.mxu0
    %v168 = vadd.f32 0.0, %v167
    %169 = vdwg.mxu0
    %v171 = vrot.slane %v124, 1
    %v174 = vrcp.pop %v124
    %v175 = vmul.f32 %v124, %v174
    %v176 = vsub.f32 1.0, %v175
    %v177 = vmul.f32 %v174, %v176
    %v178 = vadd.f32 %v174, %v177
    %vm179 = vweird.f32 %v124
    %vm180 = vweird.f32 %v174
    %vm181 = vmor %vm179, %vm180
    %v182 = vsel %vm181, %v174, %v178
    %v183 = vand.u32 2147483647, %v124
    %vm184 = vcmp.eq.f32.partialorder %v183, 8.507059e+37
    %v185 = vand.u32 %v124, 2147483648
    %v186 = vor.u32 1.1754944e-38, %v185
    %v187 = vsel %vm184, %v186, %v182
    %v188 = vmul.f32 %v146, %v187
    %v189 = vrcp.pop %v171
    %v190 = vmul.f32 %v171, %v189
    %v191 = vsub.f32 1.0, %v190
    %v192 = vmul.f32 %v189, %v191
    %v193 = vadd.f32 %v189, %v192
    %vm194 = vweird.f32 %v171
    %vm195 = vweird.f32 %v189
    %vm196 = vmor %vm194, %vm195
    %v197 = vsel %vm196, %v189, %v193
    %v198 = vand.u32 2147483647, %v171
    %vm199 = vcmp.eq.f32.partialorder %v198, 8.507059e+37
    %v200 = vand.u32 %v171, 2147483648
    %v201 = vor.u32 1.1754944e-38, %v200
    %v202 = vsel %vm199, %v201, %v197
    %v203 = vmul.f32 %v168, %v202
    %v204 = vadd.f32 %v41, %v188
    %v205 = vadd.f32 %v42, %v203
    %v206 = vmul.f32 %v204, 0.5
    %v207 = vmul.f32 %v205, 0.5
    %v208 = vld [vmem:[%s2] sm:$0xff]
    %v209 = vld [vmem:[%s2 + $0x8] sm:$0xff]
    %v210 = vld [vmem:[%s2 + $0x10] sm:$0xff]
    %v211 = vld [vmem:[%s2 + $0x18] sm:$0xff]
    %v212 = vld [vmem:[%s3] sm:$0x1]
    %v214 = vperm.slane %v212, 0
    %v218 = vrot.slane %v207, 7
    %v219 = vsel %vm100, %v218, %v206
    %v220 = vsel %vm43, %v219, 0
    %222 = vmatpush.msra.mxu0 0.0
    %223 = vmatpush.msra.mxu0 0.0
    %224 = vmatpush.msra.mxu0 0.0
    %225 = vmatpush.msra.mxu0 0.0
    %226 = vmatpush.msra.mxu0 0.0
    %227 = vmatpush.msra.mxu0 0.0
    %228 = vmatpush.msra.mxu0 0.0
    %229 = vmatpush.msra.mxu0 0.0
    %230 = vmatpush.msra.mxu0 0.0
    %231 = vmatpush.msra.mxu0 0.0
    %232 = vmatpush.msra.mxu0 0.0
    %233 = vmatpush.msra.mxu0 0.0
    %234 = vmatpush.msra.mxu0 %v211
    %235 = vmatpush.msra.mxu0 %v210
    %236 = vmatpush.msra.mxu0 %v209
    %237 = vmatpush.msra.mxu0 %v208
    %238 = vmatmul.f32.gmra.mxu0 %v220
    %v239 = vpop.f32.mrf.mxu0
    %v240 = vadd.f32 %v214, %v239
    %241 = vdwg.mxu0
    %v242 = vmul.f32 %v240, %v240
    %vm243 = vcmask 254976
    %v244 = vsel %vm243, %v242, 0.0
    %245 = vadd.xlane.f32.xlu0 %v244
    %v246 = vpop.xlane.xlu0 %245
    %v247 = vrsqrt.pop %v246
    %v248 = vmul.f32 %v247, %v246
    %v249 = vmul.f32 %v248, %v247
    %v250 = vmul.f32 0.5, %v249
    %v251 = vsub.f32 1.5, %v250
    %v252 = vmul.f32 %v247, %v251
    %v253 = vmul.f32 %v246, %v252
    %vm254 = vcmp.eq.f32.partialorder %v246, inf
    %v255 = vsel %vm254, %v246, %v253
    %vm256 = vcmp.eq.f32.partialorder %v246, 0.0
    %v257 = vand.u32 %v246, 2147483648
    %v258 = vsel %vm256, %v257, %v255
    %v259 = vmax.f32 %v258, 1e-08
    %v260 = vrcp.pop %v259
    %v261 = vmul.f32 %v259, %v260
    %v262 = vsub.f32 1.0, %v261
    %v263 = vmul.f32 %v260, %v262
    %v264 = vadd.f32 %v260, %v263
    %vm265 = vweird.f32 %v259
    %vm266 = vweird.f32 %v260
    %vm267 = vmor %vm265, %vm266
    %v268 = vsel %vm267, %v260, %v264
    %v269 = vand.u32 2147483647, %v259
    %vm270 = vcmp.eq.f32.partialorder %v269, 8.507059e+37
    %v271 = vand.u32 %v259, 2147483648
    %v272 = vor.u32 1.1754944e-38, %v271
    %v273 = vsel %vm270, %v272, %v268
    %v274 = vmul.f32 0.9, %v273
    %v275 = vmul.f32 %v240, %v274
    %276 = vst.msk [vmem:[#allocation5] sm:$0x3] %vm243, %v275
    %v277 = vld [vmem:[%s4] sm:$0xff]
    %v278 = vld [vmem:[%s4 + $0x8] sm:$0xff]
    %v279 = vld [vmem:[%s4 + $0x10] sm:$0xff]
    %v280 = vld [vmem:[%s4 + $0x18] sm:$0xff]
    %v281 = vld [vmem:[%s5] sm:$0x1]
    %v283 = vperm.slane %v281, 0
    %285 = vmatpush.msra.mxu0 0.0
    %286 = vmatpush.msra.mxu0 0.0
    %287 = vmatpush.msra.mxu0 0.0
    %288 = vmatpush.msra.mxu0 0.0
    %289 = vmatpush.msra.mxu0 0.0
    %290 = vmatpush.msra.mxu0 0.0
    %291 = vmatpush.msra.mxu0 0.0
    %292 = vmatpush.msra.mxu0 0.0
    %293 = vmatpush.msra.mxu0 0.0
    %294 = vmatpush.msra.mxu0 0.0
    %295 = vmatpush.msra.mxu0 0.0
    %296 = vmatpush.msra.mxu0 0.0
    %297 = vmatpush.msra.mxu0 %v280
    %298 = vmatpush.msra.mxu0 %v279
    %299 = vmatpush.msra.mxu0 %v278
    %300 = vmatpush.msra.mxu0 %v277
    %301 = vmatmul.f32.gmra.mxu0 %v45
    %v302 = vpop.f32.mrf.mxu0
    %v303 = vadd.f32 %v283, %v302
    %304 = vmatmul.f32.gmra.mxu0 %v68
    %v305 = vpop.f32.mrf.mxu0
    %v306 = vadd.f32 %v283, %v305
    %307 = vdwg.mxu0
    %vm308 = vcmask 130048
    %v309 = vsel %vm308, %v303, 0.0
    %310 = vadd.xlane.f32.xlu0 %v309
    %v311 = vpop.xlane.xlu0 %310
    %v312 = vsel %vm308, %v306, 0.0
    %313 = vadd.xlane.f32.xlu0 %v312
    %v314 = vpop.xlane.xlu0 %313
    %v315 = vmul.f32 %v311, 0.0625
    %v316 = vmul.f32 %v314, 0.0625
    %v317 = vsub.f32 %v303, %v315
    %v318 = vsub.f32 %v306, %v316
    %v319 = vmul.f32 %v317, %v317
    %v320 = vmul.f32 %v318, %v318
    %v321 = vsel %vm308, %v319, 0.0
    %322 = vadd.xlane.f32.xlu0 %v321
    %v323 = vpop.xlane.xlu0 %322
    %v324 = vsel %vm308, %v320, 0.0
    %325 = vadd.xlane.f32.xlu0 %v324
    %v326 = vpop.xlane.xlu0 %325
    %v327 = vmul.f32 %v323, 0.0625
    %v328 = vmul.f32 %v326, 0.0625
    %v329 = vadd.f32 %v327, 1e-05
    %v330 = vadd.f32 %v328, 1e-05
    %v331 = vrsqrt.pop %v329
    %v332 = vmul.f32 %v331, %v329
    %v333 = vmul.f32 %v332, %v331
    %v334 = vmul.f32 0.5, %v333
    %v335 = vsub.f32 1.5, %v334
    %v336 = vmul.f32 %v331, %v335
    %vm337 = vweird.f32 %v329
    %vm338 = vweird.f32 %v331
    %vm339 = vmor %vm337, %vm338
    %v340 = vsel %vm339, %v331, %v336
    %v341 = vrsqrt.pop %v330
    %v342 = vmul.f32 %v341, %v330
    %v343 = vmul.f32 %v342, %v341
    %v344 = vmul.f32 0.5, %v343
    %v345 = vsub.f32 1.5, %v344
    %v346 = vmul.f32 %v341, %v345
    %vm347 = vweird.f32 %v330
    %vm348 = vweird.f32 %v341
    %vm349 = vmor %vm347, %vm348
    %v350 = vsel %vm349, %v341, %v346
    %v351 = vmul.f32 %v317, %v340
    %v352 = vmul.f32 %v318, %v350
    %353 = vst.msk [vmem:[#allocation6] sm:$0xff] %vm308, %v351
    %354 = vst.msk [vmem:[#allocation6 + $0x8] sm:$0xff] %vm308, %v352
    // Predicated region
    $region30: #{tpu_custom_call.1} parent=1 // pred_check
      _
    $region31: #{tpu_custom_call.1} parent=1 // pred_check_branch
      %356 = sbr.rel (0) target = $region33
    $region32: #{tpu_custom_call.1} parent=1 // pred_region
      %358 = vsyncadd [#allocation4], 0
      %s360 = sshll.u32 [#allocation5], 4
      %s361 = int_to_ptr.vmem [resolvable:$true] %s360
      %s362 = sshll.u32 %s6, 4
      %s363 = int_to_ptr.hbm [resolvable:$true] %s362
      %365 = dma.vmem_to_hbm [thread:$0]  %s361, 32, %s363, [#allocation4]
    $region33: #{tpu_custom_call.1} parent=1 // pred_fallthru
      _
    // Predicated region
    $region34: #{tpu_custom_call.1} parent=1 // pred_check
      _
    $region35: #{tpu_custom_call.1} parent=1 // pred_check_branch
      %367 = sbr.rel (0) target = $region37
    $region36: #{tpu_custom_call.1} parent=1 // pred_region
      %369 = vsyncadd [#allocation7], 0
      %s370 = sshll.u32 [#allocation6], 4
      %s371 = int_to_ptr.vmem [resolvable:$true] %s370
      %s372 = sshll.u32 %s7, 4
      %s373 = int_to_ptr.hbm [resolvable:$true] %s372
      %378 = dma.vmem_to_hbm [thread:$0]  %s371, 256, %s373, [#allocation7], 128, 128, 8
    $region37: #{tpu_custom_call.1} parent=1 // pred_fallthru
      _
    // Predicated region
    $region38: #{tpu_custom_call.1} parent=1 // pred_check
      _
    $region39: #{tpu_custom_call.1} parent=1 // pred_check_branch
      %380 = sbr.rel (0) target = $region41
    $region40: #{tpu_custom_call.1} parent=1 // pred_region
      %382 = dma.done [#allocation4], 32
    $region41: #{tpu_custom_call.1} parent=1 // pred_fallthru
      _
    // Predicated region
    $region42: #{tpu_custom_call.1} parent=1 // pred_check
      _
    $region43: #{tpu_custom_call.1} parent=1 // pred_check_branch
      %384 = sbr.rel (0) target = $region45
    $region44: #{tpu_custom_call.1} parent=1 // pred_region
      %386 = dma.done [#allocation7], 256
    $region45: #{tpu_custom_call.1} parent=1 // pred_fallthru
      _
    %387 = vsyncpa [#allocation3], 1
    %388 = vsyncpa [#allocation4], 1
    %389 = vsyncpa [#allocation7], 1

// kernel: tpu_custom_call.1
$region0: #{tpu_custom_call.1}
  #allocation0 [shape = 'u32[]', space=smem, size = 0x4, offset = 0x4, fixed_abs, tag = 'smem constant byte address 0x4 - core index']
  #allocation1 [shape = 'u32[72,128]{1,0:T(1,128)}', space=vmem, size = 0x9000, scoped, tag = 'internal scratch']
  %s0 = inlined_call_operand.vmem [shape: f32[2,8,32], index: 0, kind: input, shape index: {}]
  %s1 = inlined_call_operand.hbm [shape: f32[2,8], index: 1, kind: input, shape index: {}]
  %s2 = inlined_call_operand.vmem [shape: f32[32,32], index: 2, kind: input, shape index: {}]
  %s3 = inlined_call_operand.vmem [shape: f32[1,32], index: 3, kind: input, shape index: {}]
  %s4 = inlined_call_operand.vmem [shape: f32[32,16], index: 4, kind: input, shape index: {}]
  %s5 = inlined_call_operand.vmem [shape: f32[1,16], index: 5, kind: input, shape index: {}]
  %s6 = inlined_call_operand.hbm [shape: f32[2,32], index: 6, kind: output, shape index: {0}]
  %s7 = inlined_call_operand.hbm [shape: f32[16,16], index: 7, kind: output, shape index: {1}]
  %8 = xla_tuple %s6, %s7
  %s9 = sld [smem:[#allocation0]]
  $region46: #{tpu_custom_call.1} parent=0
    _
  %s11 = ssub.s32 1, %s9
  %s12 = scalar_select 0, %s11, %s9
  $region1: #{tpu_custom_call.1} parent=0
    #allocation2 [shape = 'u8[1024]{0}', space=vmem, size = 0x400, scoped, tag = 'input window, operand 1, single buffered']
    #allocation3 [shape = 's32[1]{0}', space=sflag, size = 0x4, scoped, tag = 'scoped memory for tpu_custom_call.1']
    #allocation4 [shape = 's32[1]{0}', space=sflag, size = 0x4, scoped, tag = 'scoped memory for tpu_custom_call.1']
    #allocation5 [shape = 'u8[1024]{0}', space=vmem, size = 0x400, scoped, tag = 'output window, operand 0, single buffered']
    #allocation6 [shape = 'u8[8192]{0}', space=vmem, size = 0x2000, scoped, tag = 'output window, operand 1, single buffered']
    #allocation7 [shape = 's32[1]{0}', space=sflag, size = 0x4, scoped, tag = 'scoped memory for tpu_custom_call.1']
    %13 = vsyncpa [#allocation3], 0
    %14 = vsyncpa [#allocation4], 0
    %15 = vsyncpa [#allocation7], 0
    // Predicated region
    $region2: #{tpu_custom_call.1} parent=1 // pred_check
      _
    $region3: #{tpu_custom_call.1} parent=1 // pred_check_branch
      %17 = sbr.rel (0) target = $region5
    $region4: #{tpu_custom_call.1} parent=1 // pred_region
      _
    $region5: #{tpu_custom_call.1} parent=1 // pred_fallthru
      _
    // Predicated region
    $region6: #{tpu_custom_call.1} parent=1 // pred_check
      _
    $region7: #{tpu_custom_call.1} parent=1 // pred_check_branch
      %19 = sbr.rel (0) target = $region9
    $region8: #{tpu_custom_call.1} parent=1 // pred_region
      %21 = vsyncadd [#allocation3], 0
      %s23 = sshll.u32 %s1, 4
      %s24 = int_to_ptr.hbm [resolvable:$true] %s23
      %s25 = sshll.u32 [#allocation2], 4
      %s26 = int_to_ptr.vmem [resolvable:$true] %s25
      %28 = dma.hbm_to_vmem [thread:$0]  %s24, 32, %s26, [#allocation3]
    $region9: #{tpu_custom_call.1} parent=1 // pred_fallthru
      _
    // Predicated region
    $region10: #{tpu_custom_call.1} parent=1 // pred_check
      _
    $region11: #{tpu_custom_call.1} parent=1 // pred_check_branch
      %30 = sbr.rel (0) target = $region13
    $region12: #{tpu_custom_call.1} parent=1 // pred_region
      _
    $region13: #{tpu_custom_call.1} parent=1 // pred_fallthru
      _
    // Predicated region
    $region14: #{tpu_custom_call.1} parent=1 // pred_check
      _
    $region15: #{tpu_custom_call.1} parent=1 // pred_check_branch
      %32 = sbr.rel (0) target = $region17
    $region16: #{tpu_custom_call.1} parent=1 // pred_region
      _
    $region17: #{tpu_custom_call.1} parent=1 // pred_fallthru
      _
    // Predicated region
    $region18: #{tpu_custom_call.1} parent=1 // pred_check
      _
    $region19: #{tpu_custom_call.1} parent=1 // pred_check_branch
      %34 = sbr.rel (0) target = $region21
    $region20: #{tpu_custom_call.1} parent=1 // pred_region
      _
    $region21: #{tpu_custom_call.1} parent=1 // pred_fallthru
      _
    // Predicated region
    $region22: #{tpu_custom_call.1} parent=1 // pred_check
      _
    $region23: #{tpu_custom_call.1} parent=1 // pred_check_branch
      %36 = sbr.rel (0) target = $region25
    $region24: #{tpu_custom_call.1} parent=1 // pred_region
      _
    $region25: #{tpu_custom_call.1} parent=1 // pred_fallthru
      _
    // Predicated region
    $region26: #{tpu_custom_call.1} parent=1 // pred_check
      _
    $region27: #{tpu_custom_call.1} parent=1 // pred_check_branch
      %38 = sbr.rel (0) target = $region29
    $region28: #{tpu_custom_call.1} parent=1 // pred_region
      %40 = dma.done [#allocation3], 32
    $region29: #{tpu_custom_call.1} parent=1 // pred_fallthru
      _
    %v41 = vld [vmem:[%s0] sm:$0xff]
    %v42 = vld [vmem:[%s0 + $0x8] sm:$0xff]
    %v43 = vperm.slane %v41, 0
    %v44 = vperm.slane %v42, 0
    %v45 = vmul.f32 %v41, %v43
    %v46 = vmul.f32 %v42, %v44
    %vm47 = vcmask 261120
    %v48 = vsel %vm47, %v45, 0.0
    %49 = vadd.xlane.f32.xlu0 %v48
    %v50 = vpop.xlane.xlu0 %49
    %v51 = vsel %vm47, %v46, 0.0
    %52 = vadd.xlane.f32.xlu0 %v51
    %v53 = vpop.xlane.xlu0 %52
    %v54 = vld [vmem:[#allocation2] sm:$0x3]
    %v56 = vperm.slane %v54, 0
    %v57 = vlaneseq
    %v58 = vshrl.u32 %v57, 7
    %60 = vset.pattern.permute.xlu0 %v58
    %61 = vperm.xlu0 %60, %v56
    %v62 = vpop.permute.xlu0 %61
    %v63 = vperm.slane %v54, 1
    %v64 = vlaneseq
    %v65 = vshrl.u32 %v64, 7
    %67 = vset.pattern.permute.xlu0 %v65
    %68 = vperm.xlu0 %67, %v63
    %v69 = vpop.permute.xlu0 %68
    %v72 = vadd.f32 %v50, %v62
    %v73 = vadd.f32 %v53, %v69
    %76 = vset.pattern.permute.xlu0 0
    %77 = vperm.xlu0 %76, %v72
    %v78 = vpop.permute.xlu0 %77
    %79 = vset.pattern.permute.xlu0 0
    %80 = vperm.xlu0 %79, %v73
    %v81 = vpop.permute.xlu0 %80
    %v82 = vlaneseq
    %v83 = vand.u32 %v82, 127
    %v84 = vperm.slane %v78, %v83
    %v85 = vperm.slane %v81, %v83
    %vm86 = vcmask 1041409
    %v87 = vsel %vm86, %v85, %v84
    %vm89 = vcmask 58368
    %v90 = vsel %vm89, %v87, -inf
    %91 = vmax.xlane.f32.xlu0 %v90
    %v92 = vpop.xlane.xlu0 %91
    %v94 = vperm.slane %v92, 0
    %v95 = vperm.slane %v92, 1
    %v98 = vsub.f32 %v72, %v94
    %v99 = vsub.f32 %v73, %v95
    %v100 = vmul.f32 %v98, 1.442695
    %v101 = vpow.pop %v100
    %v102 = vmul.f32 %v99, 1.442695
    %v103 = vpow.pop %v102
    %106 = vset.pattern.permute.xlu0 0
    %107 = vperm.xlu0 %106, %v101
    %v108 = vpop.permute.xlu0 %107
    %109 = vset.pattern.permute.xlu0 0
    %110 = vperm.xlu0 %109, %v103
    %v111 = vpop.permute.xlu0 %110
    %v112 = vperm.slane %v108, %v83
    %v113 = vperm.slane %v111, %v83
    %v114 = vsel %vm86, %v113, %v112
    %v116 = vsel %vm89, %v114, 0.0
    %117 = vadd.xlane.f32.xlu0 %v116
    %v118 = vpop.xlane.xlu0 %117
    %v121 = vmul.f32 %v108, %v41
    %v122 = vmul.f32 %v111, %v42
    %v123 = vsel %vm47, %v121, 0.0
    %v124 = vrot.slane %v123, 4
    %v125 = vadd.f32 %v123, %v124
    %v126 = vrot.slane %v125, 2
    %v127 = vadd.f32 %v125, %v126
    %v128 = vrot.slane %v127, 1
    %v129 = vadd.f32 %v127, %v128
    %v130 = vsel %vm47, %v122, 0.0
    %v131 = vrot.slane %v130, 4
    %v132 = vadd.f32 %v130, %v131
    %v133 = vrot.slane %v132, 2
    %v134 = vadd.f32 %v132, %v133
    %v135 = vrot.slane %v134, 1
    %v136 = vadd.f32 %v134, %v135
    %v138 = vrot.slane %v118, 1
    %v141 = vrcp.pop %v118
    %v142 = vmul.f32 %v118, %v141
    %v143 = vsub.f32 1.0, %v142
    %v144 = vmul.f32 %v141, %v143
    %v145 = vadd.f32 %v141, %v144
    %vm146 = vweird.f32 %v118
    %vm147 = vweird.f32 %v141
    %vm148 = vmor %vm146, %vm147
    %v149 = vsel %vm148, %v141, %v145
    %v150 = vand.u32 2147483647, %v118
    %vm151 = vcmp.eq.f32.partialorder %v150, 8.507059e+37
    %v152 = vand.u32 %v118, 2147483648
    %v153 = vor.u32 1.1754944e-38, %v152
    %v154 = vsel %vm151, %v153, %v149
    %v155 = vmul.f32 %v129, %v154
    %v156 = vrcp.pop %v138
    %v157 = vmul.f32 %v138, %v156
    %v158 = vsub.f32 1.0, %v157
    %v159 = vmul.f32 %v156, %v158
    %v160 = vadd.f32 %v156, %v159
    %vm161 = vweird.f32 %v138
    %vm162 = vweird.f32 %v156
    %vm163 = vmor %vm161, %vm162
    %v164 = vsel %vm163, %v156, %v160
    %v165 = vand.u32 2147483647, %v138
    %vm166 = vcmp.eq.f32.partialorder %v165, 8.507059e+37
    %v167 = vand.u32 %v138, 2147483648
    %v168 = vor.u32 1.1754944e-38, %v167
    %v169 = vsel %vm166, %v168, %v164
    %v170 = vmul.f32 %v136, %v169
    %v171 = vadd.f32 %v41, %v155
    %v172 = vadd.f32 %v42, %v170
    %v173 = vmul.f32 %v171, 0.5
    %v174 = vmul.f32 %v172, 0.5
    %v175 = vld [vmem:[%s2] sm:$0xff]
    %v176 = vld [vmem:[%s2 + $0x8] sm:$0xff]
    %v177 = vld [vmem:[%s2 + $0x10] sm:$0xff]
    %v178 = vld [vmem:[%s2 + $0x18] sm:$0xff]
    %v179 = vld [vmem:[%s3] sm:$0x1]
    %v181 = vperm.slane %v179, 0
    %v185 = vrot.slane %v174, 7
    %v186 = vsel %vm86, %v185, %v173
    %v187 = vsel %vm47, %v186, 0
    %189 = vmatpush.msra.mxu0 0.0
    %190 = vmatpush.msra.mxu0 0.0
    %191 = vmatpush.msra.mxu0 0.0
    %192 = vmatpush.msra.mxu0 0.0
    %193 = vmatpush.msra.mxu0 0.0
    %194 = vmatpush.msra.mxu0 0.0
    %195 = vmatpush.msra.mxu0 0.0
    %196 = vmatpush.msra.mxu0 0.0
    %197 = vmatpush.msra.mxu0 0.0
    %198 = vmatpush.msra.mxu0 0.0
    %199 = vmatpush.msra.mxu0 0.0
    %200 = vmatpush.msra.mxu0 0.0
    %201 = vmatpush.msra.mxu0 %v178
    %202 = vmatpush.msra.mxu0 %v177
    %203 = vmatpush.msra.mxu0 %v176
    %204 = vmatpush.msra.mxu0 %v175
    %205 = vmatmul.f32.gmra.mxu0 %v187
    %v206 = vpop.f32.mrf.mxu0
    %v207 = vadd.f32 %v181, %v206
    %208 = vdwg.mxu0
    %v209 = vmul.f32 %v207, %v207
    %vm210 = vcmask 254976
    %v211 = vsel %vm210, %v209, 0.0
    %212 = vadd.xlane.f32.xlu0 %v211
    %v213 = vpop.xlane.xlu0 %212
    %v214 = vrsqrt.pop %v213
    %v215 = vmul.f32 %v214, %v213
    %v216 = vmul.f32 %v215, %v214
    %v217 = vmul.f32 0.5, %v216
    %v218 = vsub.f32 1.5, %v217
    %v219 = vmul.f32 %v214, %v218
    %v220 = vmul.f32 %v213, %v219
    %vm221 = vcmp.eq.f32.partialorder %v213, inf
    %v222 = vsel %vm221, %v213, %v220
    %vm223 = vcmp.eq.f32.partialorder %v213, 0.0
    %v224 = vand.u32 %v213, 2147483648
    %v225 = vsel %vm223, %v224, %v222
    %v226 = vmax.f32 %v225, 1e-08
    %v227 = vrcp.pop %v226
    %v228 = vmul.f32 %v226, %v227
    %v229 = vsub.f32 1.0, %v228
    %v230 = vmul.f32 %v227, %v229
    %v231 = vadd.f32 %v227, %v230
    %vm232 = vweird.f32 %v226
    %vm233 = vweird.f32 %v227
    %vm234 = vmor %vm232, %vm233
    %v235 = vsel %vm234, %v227, %v231
    %v236 = vand.u32 2147483647, %v226
    %vm237 = vcmp.eq.f32.partialorder %v236, 8.507059e+37
    %v238 = vand.u32 %v226, 2147483648
    %v239 = vor.u32 1.1754944e-38, %v238
    %v240 = vsel %vm237, %v239, %v235
    %v241 = vmul.f32 0.9, %v240
    %v242 = vmul.f32 %v207, %v241
    %243 = vst.msk [vmem:[#allocation5] sm:$0x3] %vm210, %v242
    %v244 = vld [vmem:[%s4] sm:$0xff]
    %v245 = vld [vmem:[%s4 + $0x8] sm:$0xff]
    %v246 = vld [vmem:[%s4 + $0x10] sm:$0xff]
    %v247 = vld [vmem:[%s4 + $0x18] sm:$0xff]
    %v248 = vld [vmem:[%s5] sm:$0x1]
    %v250 = vperm.slane %v248, 0
    %v253 = vsel %vm47, %v41, 0
    %v256 = vsel %vm47, %v42, 0
    %258 = vmatpush.msra.mxu0 0.0
    %259 = vmatpush.msra.mxu0 0.0
    %260 = vmatpush.msra.mxu0 0.0
    %261 = vmatpush.msra.mxu0 0.0
    %262 = vmatpush.msra.mxu0 0.0
    %263 = vmatpush.msra.mxu0 0.0
    %264 = vmatpush.msra.mxu0 0.0
    %265 = vmatpush.msra.mxu0 0.0
    %266 = vmatpush.msra.mxu0 0.0
    %267 = vmatpush.msra.mxu0 0.0
    %268 = vmatpush.msra.mxu0 0.0
    %269 = vmatpush.msra.mxu0 0.0
    %270 = vmatpush.msra.mxu0 %v247
    %271 = vmatpush.msra.mxu0 %v246
    %272 = vmatpush.msra.mxu0 %v245
    %273 = vmatpush.msra.mxu0 %v244
    %274 = vmatmul.f32.gmra.mxu0 %v253
    %v275 = vpop.f32.mrf.mxu0
    %v276 = vadd.f32 %v250, %v275
    %277 = vmatmul.f32.gmra.mxu0 %v256
    %v278 = vpop.f32.mrf.mxu0
    %v279 = vadd.f32 %v250, %v278
    %280 = vdwg.mxu0
    %vm281 = vcmask 130048
    %v282 = vsel %vm281, %v276, 0.0
    %283 = vadd.xlane.f32.xlu0 %v282
    %v284 = vpop.xlane.xlu0 %283
    %v285 = vsel %vm281, %v279, 0.0
    %286 = vadd.xlane.f32.xlu0 %v285
    %v287 = vpop.xlane.xlu0 %286
    %v288 = vmul.f32 %v284, 0.0625
    %v289 = vmul.f32 %v287, 0.0625
    %v290 = vsub.f32 %v276, %v288
    %v291 = vsub.f32 %v279, %v289
    %v292 = vmul.f32 %v290, %v290
    %v293 = vmul.f32 %v291, %v291
    %v294 = vsel %vm281, %v292, 0.0
    %295 = vadd.xlane.f32.xlu0 %v294
    %v296 = vpop.xlane.xlu0 %295
    %v297 = vsel %vm281, %v293, 0.0
    %298 = vadd.xlane.f32.xlu0 %v297
    %v299 = vpop.xlane.xlu0 %298
    %v300 = vmul.f32 %v296, 0.0625
    %v301 = vmul.f32 %v299, 0.0625
    %v302 = vadd.f32 %v300, 1e-05
    %v303 = vadd.f32 %v301, 1e-05
    %v304 = vrsqrt.pop %v302
    %v305 = vmul.f32 %v304, %v302
    %v306 = vmul.f32 %v305, %v304
    %v307 = vmul.f32 0.5, %v306
    %v308 = vsub.f32 1.5, %v307
    %v309 = vmul.f32 %v304, %v308
    %vm310 = vweird.f32 %v302
    %vm311 = vweird.f32 %v304
    %vm312 = vmor %vm310, %vm311
    %v313 = vsel %vm312, %v304, %v309
    %v314 = vrsqrt.pop %v303
    %v315 = vmul.f32 %v314, %v303
    %v316 = vmul.f32 %v315, %v314
    %v317 = vmul.f32 0.5, %v316
    %v318 = vsub.f32 1.5, %v317
    %v319 = vmul.f32 %v314, %v318
    %vm320 = vweird.f32 %v303
    %vm321 = vweird.f32 %v314
    %vm322 = vmor %vm320, %vm321
    %v323 = vsel %vm322, %v314, %v319
    %v324 = vmul.f32 %v290, %v313
    %v325 = vmul.f32 %v291, %v323
    %326 = vst.msk [vmem:[#allocation6] sm:$0xff] %vm281, %v324
    %327 = vst.msk [vmem:[#allocation6 + $0x8] sm:$0xff] %vm281, %v325
    // Predicated region
    $region30: #{tpu_custom_call.1} parent=1 // pred_check
      _
    $region31: #{tpu_custom_call.1} parent=1 // pred_check_branch
      %329 = sbr.rel (0) target = $region33
    $region32: #{tpu_custom_call.1} parent=1 // pred_region
      %331 = vsyncadd [#allocation4], 0
      %s333 = sshll.u32 [#allocation5], 4
      %s334 = int_to_ptr.vmem [resolvable:$true] %s333
      %s335 = sshll.u32 %s6, 4
      %s336 = int_to_ptr.hbm [resolvable:$true] %s335
      %338 = dma.vmem_to_hbm [thread:$0]  %s334, 32, %s336, [#allocation4]
    $region33: #{tpu_custom_call.1} parent=1 // pred_fallthru
      _
    // Predicated region
    $region34: #{tpu_custom_call.1} parent=1 // pred_check
      _
    $region35: #{tpu_custom_call.1} parent=1 // pred_check_branch
      %340 = sbr.rel (0) target = $region37
    $region36: #{tpu_custom_call.1} parent=1 // pred_region
      %342 = vsyncadd [#allocation7], 0
      %s343 = sshll.u32 [#allocation6], 4
      %s344 = int_to_ptr.vmem [resolvable:$true] %s343
      %s345 = sshll.u32 %s7, 4
      %s346 = int_to_ptr.hbm [resolvable:$true] %s345
      %351 = dma.vmem_to_hbm [thread:$0]  %s344, 256, %s346, [#allocation7], 128, 128, 8
    $region37: #{tpu_custom_call.1} parent=1 // pred_fallthru
      _
    // Predicated region
    $region38: #{tpu_custom_call.1} parent=1 // pred_check
      _
    $region39: #{tpu_custom_call.1} parent=1 // pred_check_branch
      %353 = sbr.rel (0) target = $region41
    $region40: #{tpu_custom_call.1} parent=1 // pred_region
      %355 = dma.done [#allocation4], 32
    $region41: #{tpu_custom_call.1} parent=1 // pred_fallthru
      _
    // Predicated region
    $region42: #{tpu_custom_call.1} parent=1 // pred_check
      _
    $region43: #{tpu_custom_call.1} parent=1 // pred_check_branch
      %357 = sbr.rel (0) target = $region45
    $region44: #{tpu_custom_call.1} parent=1 // pred_region
      %359 = dma.done [#allocation7], 256
    $region45: #{tpu_custom_call.1} parent=1 // pred_fallthru
      _
    %360 = vsyncpa [#allocation3], 1
    %361 = vsyncpa [#allocation4], 1
    %362 = vsyncpa [#allocation7], 1

</llo_original>
